<compile_context>
chip_gen: v6e
topology: v6e:2x2x1
jax: 0.10.0
libtpu: 0.0.40
codegen_flags: <defaults>
</compile_context>

<pallas_src>
import functools

import jax
import jax.numpy as jnp
from jax.experimental import pallas as pl
from jax.experimental.pallas import tpu as pltpu


# ----------------------------------------------------------------------------- kernel
def vanet_kernel(x_ref, w1_ref, w2_ref, wh_ref, b_ref, q_ref, *, action_dim):
    """One batch tile of the fused VAnet forward.

    x_ref : (TB, state_dim)        f32
    w1_ref: (state_dim, 64)        bf16 (or f32)
    w2_ref: (64, hidden_dim)       bf16 (or f32)
    wh_ref: (hidden_dim, A+1)      bf16 (or f32)   fused [A | V - mean_A] head
    b_ref : (3, max_width)         f32             row0=b1, row1=b2, row2=b_head
    q_ref : (TB, action_dim)       f32
    """
    cdt = w1_ref.dtype  # MXU operand dtype (bf16 on v5e/v6e/v7x path)

    n1 = w1_ref.shape[1]
    n2 = w2_ref.shape[1]
    nh = wh_ref.shape[1]  # action_dim + 1

    # x1: Linear(state_dim, 64) + ReLU   (f32 accumulate, f32 epilogue)
    x = x_ref[...].astype(cdt)
    h1 = jnp.dot(x, w1_ref[...], preferred_element_type=jnp.float32)
    h1 = jnp.maximum(h1 + b_ref[0:1, :n1], 0.0)

    # x2: Linear(64, hidden_dim) + ReLU
    h2 = jnp.dot(h1.astype(cdt), w2_ref[...], preferred_element_type=jnp.float32)
    h2 = jnp.maximum(h2 + b_ref[1:2, :n2], 0.0)

    # Fused dueling head: columns [0:A) carry A, column A carries V - mean(A)
    head = jnp.dot(h2.astype(cdt), wh_ref[...], preferred_element_type=jnp.float32)
    head = head + b_ref[2:3, :nh]

    a = head[:, :action_dim]
    v = head[:, action_dim:action_dim + 1]
    q_ref[...] = (a + v).astype(q_ref.dtype)


# ----------------------------------------------------------------------------- wrapper
def pack_params(p, compute_dtype=jnp.bfloat16):
    """Fuse the A/V heads, fold the action-mean, and pack biases (trace-time only)."""
    wa, ba = p["wa"], p["ba"]
    wv, bv = p["wv"], p["bv"]
    action_dim = wa.shape[1]

    wa_mean = jnp.mean(wa, axis=1, keepdims=True)            # (hidden, 1)
    ba_mean = jnp.mean(ba, axis=1, keepdims=True)            # (1, 1)
    w_head = jnp.concatenate([wa, wv - wa_mean], axis=1)     # (hidden, A+1)
    b_head = jnp.concatenate([ba, bv - ba_mean], axis=1)     # (1, A+1)

    w1 = p["w1"].astype(compute_dtype)
    w2 = p["w2"].astype(compute_dtype)
    wh = w_head.astype(compute_dtype)

    biases = [p["b1"], p["b2"], b_head]
    max_w = max(b.shape[1] for b in biases)
    b_pack = jnp.concatenate(
        [jnp.pad(b, ((0, 0), (0, max_w - b.shape[1]))) for b in biases], axis=0
    ).astype(jnp.float32)                                    # (3, max_w)

    return w1, w2, wh, b_pack, action_dim


def vanet_forward(x, packed, *, max_batch_tile=512):
    """x: (B, state_dim) f32; packed = pack_params(...)."""
    w1, w2, wh, b_pack, action_dim = packed
    B, state_dim = x.shape

    # Batch tile: whole batch if small, else 512-row tiles (multiple of 8; sized so
    # 2 x (activations) + resident weights fit v7x's 64 MiB VMEM / 32 MiB scoped).
    TB = B if B <= max_batch_tile else max_batch_tile
    grid = (pl.cdiv(B, TB),)

    kernel = functools.partial(vanet_kernel, action_dim=action_dim)

    return pl.pallas_call(
        kernel,
        out_shape=jax.ShapeDtypeStruct((B, action_dim), jnp.float32),
        grid_spec=pltpu.PrefetchScalarGridSpec(
            num_scalar_prefetch=0,
            grid=grid,
            in_specs=[
                pl.BlockSpec((TB, state_dim), lambda i: (i, 0)),   # x: batch-tiled
                pl.BlockSpec(w1.shape, lambda i: (0, 0)),          # weights stay
                pl.BlockSpec(w2.shape, lambda i: (0, 0)),          # VMEM-resident
                pl.BlockSpec(wh.shape, lambda i: (0, 0)),
                pl.BlockSpec(b_pack.shape, lambda i: (0, 0)),
            ],
            out_specs=pl.BlockSpec((TB, action_dim), lambda i: (i, 0)),
        ),
        compiler_params=pltpu.CompilerParams(
            dimension_semantics=("parallel",),
        ),
    )(x, w1, w2, wh, b_pack)


# ----------------------------------------------------------------------------- init & refs
def init_params(key, state_dim, hidden_dim, action_dim):
    """Deterministic synthetic init (shapes match torch.nn.Linear layers, W transposed)."""
    ks = jax.random.split(key, 8)

    def lin(kw, kb, fan_in, fan_out):
        bound = 1.0 / jnp.sqrt(fan_in)
        w = jax.random.uniform(kw, (fan_in, fan_out), jnp.float32, -bound, bound)
        b = jax.random.uniform(kb, (1, fan_out), jnp.float32, -bound, bound)
        return w, b

    w1, b1 = lin(ks[0], ks[1], state_dim, 64)
    w2, b2 = lin(ks[2], ks[3], 64, hidden_dim)
    wa, ba = lin(ks[4], ks[5], hidden_dim, action_dim)
    wv, bv = lin(ks[6], ks[7], hidden_dim, 1)
    return {"w1": w1, "b1": b1, "w2": w2, "b2": b2,
            "wa": wa, "ba": ba, "wv": wv, "bv": bv}


def vanet_reference(x, p):
    """Pure-JAX f32 reference of the PyTorch forward (exact module semantics)."""
    h1 = jnp.maximum(x @ p["w1"] + p["b1"], 0.0)
    h2 = jnp.maximum(h1 @ p["w2"] + p["b2"], 0.0)
    a = h2 @ p["wa"] + p["ba"]
    v = h2 @ p["wv"] + p["bv"]
    return v + a - a.mean(axis=1, keepdims=True)


def vanet_reference_packed(x, packed):
    """Pure-JAX reference using the SAME fused/packed (bf16) params as the kernel."""
    w1, w2, wh, b_pack, A = packed
    cdt = w1.dtype
    n1, n2, nh = w1.shape[1], w2.shape[1], wh.shape[1]
    h1 = jnp.maximum(
        jnp.dot(x.astype(cdt), w1, preferred_element_type=jnp.float32) + b_pack[0:1, :n1], 0.0)
    h2 = jnp.maximum(
        jnp.dot(h1.astype(cdt), w2, preferred_element_type=jnp.float32) + b_pack[1:2, :n2], 0.0)
    head = jnp.dot(h2.astype(cdt), wh, preferred_element_type=jnp.float32) + b_pack[2:3, :nh]
    return head[:, :A] + head[:, A:A + 1]


# ----------------------------------------------------------------------------- demo / self-test
if __name__ == "__main__":
    B, state_dim, hidden_dim, action_dim = 8, 4, 32, 6

    key = jax.random.PRNGKey(0)
    k_x, k_p = jax.random.split(key)
    x = jax.random.normal(k_x, (B, state_dim), jnp.float32)
    params = init_params(k_p, state_dim, hidden_dim, action_dim)

    packed = pack_params(params, compute_dtype=jnp.bfloat16)

    q = vanet_forward(x, packed)
    q = jax.block_until_ready(q)
    assert q.shape == (B, action_dim)

    # (1) Tight check vs. a pure-JAX path using identical fused bf16 params.
    q_ref_packed = vanet_reference_packed(x, packed)
    assert jnp.allclose(q, q_ref_packed, atol=2e-3, rtol=2e-3), "mismatch vs packed reference"

    # (2) Loose check vs. the exact f32 PyTorch-equivalent forward (bf16 weights).
    q_ref = vanet_reference(x, params)
    assert jnp.allclose(q, q_ref, atol=5e-2, rtol=5e-2), "mismatch vs f32 reference"

    print("KERNEL_OK")
</pallas_src>

<mosaic_0001>
module attributes {stable_mosaic.version = 11 : i64} {
  func.func @vanet_kernel(%arg0: i32, %arg1: memref<8x4xf32, #tpu.memory_space<vmem>>, %arg2: memref<4x64xbf16, #tpu.memory_space<vmem>>, %arg3: memref<64x32xbf16, #tpu.memory_space<vmem>>, %arg4: memref<32x7xbf16, #tpu.memory_space<vmem>>, %arg5: memref<3x64xf32, #tpu.memory_space<vmem>>, %arg6: memref<8x6xf32, #tpu.memory_space<vmem>>) attributes {dimension_semantics = [#tpu.dimension_semantics<parallel>], iteration_bounds = array<i64: 1>, scalar_prefetch = 0 : i64, scratch_operands = 0 : i64, tpu.core_type = #tpu.core_type<tc>, window_params = [{transform_indices = @transform_0, window_bounds = array<i64: 8, 4>}, {pipeline_mode = #tpu.pipeline_mode<synchronous>, transform_indices = @transform_1, window_bounds = array<i64: 4, 64>}, {pipeline_mode = #tpu.pipeline_mode<synchronous>, transform_indices = @transform_2, window_bounds = array<i64: 64, 32>}, {pipeline_mode = #tpu.pipeline_mode<synchronous>, transform_indices = @transform_3, window_bounds = array<i64: 32, 7>}, {pipeline_mode = #tpu.pipeline_mode<synchronous>, transform_indices = @transform_4, window_bounds = array<i64: 3, 64>}, {transform_indices = @transform_5, window_bounds = array<i64: 8, 6>}]} {
    %c0 = arith.constant 0 : index
    %c0_0 = arith.constant 0 : index
    %0 = vector.load %arg1[%c0, %c0_0] : memref<8x4xf32, #tpu.memory_space<vmem>>, vector<8x4xf32>
    %1 = arith.truncf %0 : vector<8x4xf32> to vector<8x4xbf16>
    %c0_1 = arith.constant 0 : index
    %c0_2 = arith.constant 0 : index
    %2 = vector.load %arg2[%c0_1, %c0_2] : memref<4x64xbf16, #tpu.memory_space<vmem>>, vector<4x64xbf16>
    %cst = arith.constant dense<0.000000e+00> : vector<8x64xf32>
    %3 = tpu.matmul %1, %2, %cst {dimension_numbers = #tpu.dot_dimension_numbers<[1], [0], [0], [1], [0, 0, 1, 1], [], []>} : vector<8x4xbf16>, vector<4x64xbf16>, vector<8x64xf32> -> vector<8x64xf32>
    %c0_3 = arith.constant 0 : index
    %c0_4 = arith.constant 0 : index
    %4 = vector.load %arg5[%c0_3, %c0_4] : memref<3x64xf32, #tpu.memory_space<vmem>>, vector<1x64xf32>
    %5 = vector.broadcast %4 : vector<1x64xf32> to vector<8x64xf32>
    %6 = arith.addf %3, %5 : vector<8x64xf32>
    %cst_5 = arith.constant 0.000000e+00 : f32
    %7 = vector.broadcast %cst_5 : f32 to vector<8x64xf32>
    %8 = arith.maximumf %6, %7 : vector<8x64xf32>
    %9 = arith.truncf %8 : vector<8x64xf32> to vector<8x64xbf16>
    %c0_6 = arith.constant 0 : index
    %c0_7 = arith.constant 0 : index
    %10 = vector.load %arg3[%c0_6, %c0_7] : memref<64x32xbf16, #tpu.memory_space<vmem>>, vector<64x32xbf16>
    %cst_8 = arith.constant dense<0.000000e+00> : vector<8x32xf32>
    %11 = tpu.matmul %9, %10, %cst_8 {dimension_numbers = #tpu.dot_dimension_numbers<[1], [0], [0], [1], [0, 0, 1, 1], [], []>} : vector<8x64xbf16>, vector<64x32xbf16>, vector<8x32xf32> -> vector<8x32xf32>
    %c1 = arith.constant 1 : index
    %c0_9 = arith.constant 0 : index
    %12 = vector.load %arg5[%c1, %c0_9] : memref<3x64xf32, #tpu.memory_space<vmem>>, vector<1x32xf32>
    %13 = vector.broadcast %12 : vector<1x32xf32> to vector<8x32xf32>
    %14 = arith.addf %11, %13 : vector<8x32xf32>
    %cst_10 = arith.constant 0.000000e+00 : f32
    %15 = vector.broadcast %cst_10 : f32 to vector<8x32xf32>
    %16 = arith.maximumf %14, %15 : vector<8x32xf32>
    %17 = arith.truncf %16 : vector<8x32xf32> to vector<8x32xbf16>
    %c0_11 = arith.constant 0 : index
    %c0_12 = arith.constant 0 : index
    %18 = vector.load %arg4[%c0_11, %c0_12] : memref<32x7xbf16, #tpu.memory_space<vmem>>, vector<32x7xbf16>
    %cst_13 = arith.constant dense<0.000000e+00> : vector<8x7xf32>
    %19 = tpu.matmul %17, %18, %cst_13 {dimension_numbers = #tpu.dot_dimension_numbers<[1], [0], [0], [1], [0, 0, 1, 1], [], []>} : vector<8x32xbf16>, vector<32x7xbf16>, vector<8x7xf32> -> vector<8x7xf32>
    %c2 = arith.constant 2 : index
    %c0_14 = arith.constant 0 : index
    %20 = vector.load %arg5[%c2, %c0_14] : memref<3x64xf32, #tpu.memory_space<vmem>>, vector<1x7xf32>
    %21 = vector.broadcast %20 : vector<1x7xf32> to vector<8x7xf32>
    %22 = arith.addf %19, %21 : vector<8x7xf32>
    %23 = vector.extract_strided_slice %22 {offsets = [0, 0], sizes = [8, 6], strides = [1, 1]} : vector<8x7xf32> to vector<8x6xf32>
    %24 = vector.extract_strided_slice %22 {offsets = [0, 6], sizes = [8, 1], strides = [1, 1]} : vector<8x7xf32> to vector<8x1xf32>
    %25 = vector.broadcast %24 : vector<8x1xf32> to vector<8x6xf32>
    %26 = arith.addf %23, %25 : vector<8x6xf32>
    %c0_15 = arith.constant 0 : index
    %c0_16 = arith.constant 0 : index
    %27 = vector.load %arg6[%c0_15, %c0_16] : memref<8x6xf32, #tpu.memory_space<vmem>>, vector<8x6xf32>
    tpu.vector_store %arg6[%c0_15, %c0_16], %26 {strides = array<i32>} : memref<8x6xf32, #tpu.memory_space<vmem>>, vector<8x6xf32>,
    return
  }
  func.func @transform_0(%arg0: i32) -> (i32, i32) {
    %c0_i32 = arith.constant 0 : i32
    %c0_i32_0 = arith.constant 0 : i32
    return %arg0, %c0_i32 : i32, i32
  }
  func.func @transform_1(%arg0: i32) -> (i32, i32) {
    %c0_i32 = arith.constant 0 : i32
    %c0_i32_0 = arith.constant 0 : i32
    %c0_i32_1 = arith.constant 0 : i32
    return %c0_i32, %c0_i32_0 : i32, i32
  }
  func.func @transform_2(%arg0: i32) -> (i32, i32) {
    %c0_i32 = arith.constant 0 : i32
    %c0_i32_0 = arith.constant 0 : i32
    %c0_i32_1 = arith.constant 0 : i32
    return %c0_i32, %c0_i32_0 : i32, i32
  }
  func.func @transform_3(%arg0: i32) -> (i32, i32) {
    %c0_i32 = arith.constant 0 : i32
    %c0_i32_0 = arith.constant 0 : i32
    %c0_i32_1 = arith.constant 0 : i32
    return %c0_i32, %c0_i32_0 : i32, i32
  }
  func.func @transform_4(%arg0: i32) -> (i32, i32) {
    %c0_i32 = arith.constant 0 : i32
    %c0_i32_0 = arith.constant 0 : i32
    %c0_i32_1 = arith.constant 0 : i32
    return %c0_i32, %c0_i32_0 : i32, i32
  }
  func.func @transform_5(%arg0: i32) -> (i32, i32) {
    %c0_i32 = arith.constant 0 : i32
    %c0_i32_0 = arith.constant 0 : i32
    return %arg0, %c0_i32 : i32, i32
  }
}

</mosaic_0001>

<llo_original>
// kernel: tpu_custom_call.1
$region0: #{tpu_custom_call.1}
  #allocation0 [shape = 'u32[]', space=smem, size = 0x4, offset = 0x4, fixed_abs, tag = 'smem constant byte address 0x4 - core index']
  #allocation1 [shape = 'u32[144,128]{1,0:T(1,128)}', space=vmem, size = 0x12000, scoped, tag = 'internal scratch']
  %s0 = inlined_call_operand.vmem [shape: f32[8,4], index: 0, kind: input, shape index: {}]
  %s1 = inlined_call_operand.vmem [shape: bf16[4,64], index: 1, kind: input, shape index: {}]
  %s2 = inlined_call_operand.vmem [shape: bf16[64,32], index: 2, kind: input, shape index: {}]
  %s3 = inlined_call_operand.vmem [shape: bf16[32,7], index: 3, kind: input, shape index: {}]
  %s4 = inlined_call_operand.vmem [shape: f32[3,64], index: 4, kind: input, shape index: {}]
  %s5 = inlined_call_operand.hbm [shape: f32[8,6], index: 5, kind: output, shape index: {}]
  %s6 = sld [smem:[#allocation0]]
  $region30: #{tpu_custom_call.1} parent=0
    _
  %s8 = ssub.s32 1, %s6
  %s9 = scalar_select 0, %s8, %s6
  $region1: #{tpu_custom_call.1} parent=0
    #allocation2 [shape = 'u8[4096]{0}', space=vmem, size = 0x1000, scoped, tag = 'output window, operand 0, single buffered']
    #allocation3 [shape = 's32[1]{0}', space=sflag, size = 0x4, scoped, tag = 'scoped memory for tpu_custom_call.1']
    %10 = vsyncpa [#allocation3], 0
    // Predicated region
    $region2: #{tpu_custom_call.1} parent=1 // pred_check
      _
    $region3: #{tpu_custom_call.1} parent=1 // pred_check_branch
      %12 = sbr.rel (0) target = $region5
    $region4: #{tpu_custom_call.1} parent=1 // pred_region
      _
    $region5: #{tpu_custom_call.1} parent=1 // pred_fallthru
      _
    // Predicated region
    $region6: #{tpu_custom_call.1} parent=1 // pred_check
      _
    $region7: #{tpu_custom_call.1} parent=1 // pred_check_branch
      %14 = sbr.rel (0) target = $region9
    $region8: #{tpu_custom_call.1} parent=1 // pred_region
      _
    $region9: #{tpu_custom_call.1} parent=1 // pred_fallthru
      _
    // Predicated region
    $region10: #{tpu_custom_call.1} parent=1 // pred_check
      _
    $region11: #{tpu_custom_call.1} parent=1 // pred_check_branch
      %16 = sbr.rel (0) target = $region13
    $region12: #{tpu_custom_call.1} parent=1 // pred_region
      _
    $region13: #{tpu_custom_call.1} parent=1 // pred_fallthru
      _
    // Predicated region
    $region14: #{tpu_custom_call.1} parent=1 // pred_check
      _
    $region15: #{tpu_custom_call.1} parent=1 // pred_check_branch
      %18 = sbr.rel (0) target = $region17
    $region16: #{tpu_custom_call.1} parent=1 // pred_region
      _
    $region17: #{tpu_custom_call.1} parent=1 // pred_fallthru
      _
    // Predicated region
    $region18: #{tpu_custom_call.1} parent=1 // pred_check
      _
    $region19: #{tpu_custom_call.1} parent=1 // pred_check_branch
      %20 = sbr.rel (0) target = $region21
    $region20: #{tpu_custom_call.1} parent=1 // pred_region
      _
    $region21: #{tpu_custom_call.1} parent=1 // pred_fallthru
      _
    %v22 = vld [vmem:[%s0] sm:$0xff]
    %v23 = vpack.c.bf16 %v22, %v22
    %v24 = vld [vmem:[%s1] sm:$0x3]
    %v25 = vld [vmem:[%s4] sm:$0x1]
    %v26 = vlaneseq
    %v27 = vshrl.u32 %v26, 7
    %v28 = vsub.s32 0, %v27
    %v29 = vrot.slane %v25, %v28
    %vm30 = vcmask 31744
    %v32 = vsel %vm30, %v23, 0
    %vm34 = vcmask 1041408
    %v36 = vsel %vm34, %v24, 0
    %38 = vmatprep.subr.bf16.mxu0 0
    %39 = vmatpush1.bf16.msra.mxu0 0
    %40 = vmatprep.subr.bf16.mxu0 0
    %41 = vmatpush1.bf16.msra.mxu0 0
    %42 = vmatprep.subr.bf16.mxu0 0
    %43 = vmatpush1.bf16.msra.mxu0 0
    %44 = vmatprep.subr.bf16.mxu0 0
    %45 = vmatpush1.bf16.msra.mxu0 0
    %46 = vmatprep.subr.bf16.mxu0 0
    %47 = vmatpush1.bf16.msra.mxu0 0
    %48 = vmatprep.subr.bf16.mxu0 0
    %49 = vmatpush1.bf16.msra.mxu0 0
    %50 = vmatprep.subr.bf16.mxu0 0
    %51 = vmatpush1.bf16.msra.mxu0 0
    %52 = vmatprep.subr.bf16.mxu0 0
    %53 = vmatpush1.bf16.msra.mxu0 %v36
    %54 = vmatprep.subr.bf16.mxu0 0
    %55 = vmatpush2.bf16.msra.mxu0 0
    %56 = vmatprep.subr.bf16.mxu0 0
    %57 = vmatpush2.bf16.msra.mxu0 0
    %58 = vmatprep.subr.bf16.mxu0 0
    %59 = vmatpush2.bf16.msra.mxu0 0
    %60 = vmatprep.subr.bf16.mxu0 0
    %61 = vmatpush2.bf16.msra.mxu0 0
    %62 = vmatprep.subr.bf16.mxu0 0
    %63 = vmatpush2.bf16.msra.mxu0 0
    %64 = vmatprep.subr.bf16.mxu0 0
    %65 = vmatpush2.bf16.msra.mxu0 0
    %66 = vmatprep.subr.bf16.mxu0 0
    %67 = vmatpush2.bf16.msra.mxu0 0
    %68 = vmatprep.subr.bf16.mxu0 0
    %69 = vmatpush2.bf16.msra.mxu0 0
    %70 = vmatprep.mubr.bf16.mxu0 0
    %71 = vmatmul.mubr.bf16.gmra.mxu0 %v32
    %v72 = vpop.f32.mrf.mxu0
    %v73 = vadd.f32 %v29, %v72
    %v74 = vpop.f32.mrf.mxu0
    %v75 = vpop.f32.mrf.mxu0
    %v76 = vpop.f32.mrf.mxu0
    %77 = vdwg.mxu0
    %v78 = vmax.f32 %v73, 0.0
    %v79 = vpack.c.bf16 %v78, %v78
    %v80 = vld [vmem:[%s2] sm:$0xf]
    %v81 = vld [vmem:[%s2 + $0x4] sm:$0xf]
    %v82 = vld [vmem:[%s2 + $0x8] sm:$0xf]
    %v83 = vld [vmem:[%s2 + $0xc] sm:$0xf]
    %v84 = vld [vmem:[%s2 + $0x10] sm:$0xf]
    %v85 = vld [vmem:[%s2 + $0x14] sm:$0xf]
    %v86 = vld [vmem:[%s2 + $0x18] sm:$0xf]
    %v87 = vld [vmem:[%s2 + $0x1c] sm:$0xf]
    %v88 = vld [vmem:[%s4 + $0x1] sm:$0x1]
    %v89 = vlaneseq
    %v90 = vshrl.u32 %v89, 7
    %v91 = vsub.s32 0, %v90
    %v92 = vrot.slane %v88, %v91
    %v101 = vunpack.c.l.b16 %v80
    %v102 = vunpack.c.l.b16 %v81
    %v103 = vunpack.c.l.b16 %v82
    %v104 = vunpack.c.l.b16 %v83
    %v105 = vunpack.c.l.b16 %v84
    %v106 = vunpack.c.l.b16 %v85
    %v107 = vunpack.c.l.b16 %v86
    %v108 = vunpack.c.l.b16 %v87
    %v109 = vpack.c.b16 %v102, %v101
    %v110 = vpack.c.b16 %v104, %v103
    %v111 = vpack.c.b16 %v106, %v105
    %v112 = vpack.c.b16 %v108, %v107
    %vm117 = vcmask 523264
    %v119 = vsel %vm117, %v79, 0
    %121 = vmatprep.subr.bf16.mxu0 0
    %122 = vmatpush1.bf16.msra.mxu0 0
    %123 = vmatprep.subr.bf16.mxu0 0
    %124 = vmatpush1.bf16.msra.mxu0 0
    %125 = vmatprep.subr.bf16.mxu0 0
    %126 = vmatpush1.bf16.msra.mxu0 0
    %127 = vmatprep.subr.bf16.mxu0 0
    %128 = vmatpush1.bf16.msra.mxu0 0
    %129 = vmatprep.subr.bf16.mxu0 0
    %130 = vmatpush1.bf16.msra.mxu0 %v112
    %131 = vmatprep.subr.bf16.mxu0 0
    %132 = vmatpush1.bf16.msra.mxu0 %v111
    %133 = vmatprep.subr.bf16.mxu0 0
    %134 = vmatpush1.bf16.msra.mxu0 %v110
    %135 = vmatprep.subr.bf16.mxu0 0
    %136 = vmatpush1.bf16.msra.mxu0 %v109
    %137 = vmatprep.subr.bf16.mxu0 0
    %138 = vmatpush2.bf16.msra.mxu0 0
    %139 = vmatprep.subr.bf16.mxu0 0
    %140 = vmatpush2.bf16.msra.mxu0 0
    %141 = vmatprep.subr.bf16.mxu0 0
    %142 = vmatpush2.bf16.msra.mxu0 0
    %143 = vmatprep.subr.bf16.mxu0 0
    %144 = vmatpush2.bf16.msra.mxu0 0
    %145 = vmatprep.subr.bf16.mxu0 0
    %146 = vmatpush2.bf16.msra.mxu0 0
    %147 = vmatprep.subr.bf16.mxu0 0
    %148 = vmatpush2.bf16.msra.mxu0 0
    %149 = vmatprep.subr.bf16.mxu0 0
    %150 = vmatpush2.bf16.msra.mxu0 0
    %151 = vmatprep.subr.bf16.mxu0 0
    %152 = vmatpush2.bf16.msra.mxu0 0
    %153 = vmatprep.mubr.bf16.mxu0 0
    %154 = vmatmul.mubr.bf16.gmra.mxu0 %v119
    %v155 = vpop.f32.mrf.mxu0
    %v156 = vadd.f32 %v92, %v155
    %v157 = vpop.f32.mrf.mxu0
    %v158 = vpop.f32.mrf.mxu0
    %v159 = vpop.f32.mrf.mxu0
    %160 = vdwg.mxu0
    %v161 = vmax.f32 %v156, 0.0
    %v162 = vpack.c.bf16 %v161, %v161
    %v163 = vld [vmem:[%s3] sm:$0xf]
    %v164 = vld [vmem:[%s3 + $0x4] sm:$0xf]
    %v165 = vld [vmem:[%s3 + $0x8] sm:$0xf]
    %v166 = vld [vmem:[%s3 + $0xc] sm:$0xf]
    %v167 = vld [vmem:[%s4 + $0x2] sm:$0x1]
    %v168 = vlaneseq
    %v169 = vshrl.u32 %v168, 7
    %v170 = vsub.s32 0, %v169
    %v171 = vrot.slane %v167, %v170
    %v176 = vunpack.c.l.b16 %v163
    %v177 = vunpack.c.l.b16 %v164
    %v178 = vunpack.c.l.b16 %v165
    %v179 = vunpack.c.l.b16 %v166
    %v180 = vpack.c.b16 %v177, %v176
    %v181 = vpack.c.b16 %v179, %v178
    %vm184 = vcmask 261120
    %v186 = vsel %vm184, %v162, 0
    %188 = vmatprep.subr.bf16.mxu0 0
    %189 = vmatpush1.bf16.msra.mxu0 0
    %190 = vmatprep.subr.bf16.mxu0 0
    %191 = vmatpush1.bf16.msra.mxu0 0
    %192 = vmatprep.subr.bf16.mxu0 0
    %193 = vmatpush1.bf16.msra.mxu0 0
    %194 = vmatprep.subr.bf16.mxu0 0
    %195 = vmatpush1.bf16.msra.mxu0 0
    %196 = vmatprep.subr.bf16.mxu0 0
    %197 = vmatpush1.bf16.msra.mxu0 0
    %198 = vmatprep.subr.bf16.mxu0 0
    %199 = vmatpush1.bf16.msra.mxu0 0
    %200 = vmatprep.subr.bf16.mxu0 0
    %201 = vmatpush1.bf16.msra.mxu0 %v181
    %202 = vmatprep.subr.bf16.mxu0 0
    %203 = vmatpush1.bf16.msra.mxu0 %v180
    %204 = vmatprep.subr.bf16.mxu0 0
    %205 = vmatpush2.bf16.msra.mxu0 0
    %206 = vmatprep.subr.bf16.mxu0 0
    %207 = vmatpush2.bf16.msra.mxu0 0
    %208 = vmatprep.subr.bf16.mxu0 0
    %209 = vmatpush2.bf16.msra.mxu0 0
    %210 = vmatprep.subr.bf16.mxu0 0
    %211 = vmatpush2.bf16.msra.mxu0 0
    %212 = vmatprep.subr.bf16.mxu0 0
    %213 = vmatpush2.bf16.msra.mxu0 0
    %214 = vmatprep.subr.bf16.mxu0 0
    %215 = vmatpush2.bf16.msra.mxu0 0
    %216 = vmatprep.subr.bf16.mxu0 0
    %217 = vmatpush2.bf16.msra.mxu0 0
    %218 = vmatprep.subr.bf16.mxu0 0
    %219 = vmatpush2.bf16.msra.mxu0 0
    %220 = vmatprep.mubr.bf16.mxu0 0
    %221 = vmatmul.mubr.bf16.gmra.mxu0 %v186
    %v222 = vpop.f32.mrf.mxu0
    %v223 = vadd.f32 %v171, %v222
    %v224 = vpop.f32.mrf.mxu0
    %v225 = vpop.f32.mrf.mxu0
    %v226 = vpop.f32.mrf.mxu0
    %227 = vdwg.mxu0
    %229 = vset.pattern.permute.xlu0 6
    %230 = vperm.xlu0 %229, %v223
    %v231 = vpop.permute.xlu0 %230
    %v233 = vadd.f32 %v223, %v231
    %vm234 = vcmask 48128
    %235 = vst.msk [vmem:[#allocation2] sm:$0xff] %vm234, %v233
    // Predicated region
    $region22: #{tpu_custom_call.1} parent=1 // pred_check
      _
    $region23: #{tpu_custom_call.1} parent=1 // pred_check_branch
      %237 = sbr.rel (0) target = $region25
    $region24: #{tpu_custom_call.1} parent=1 // pred_region
      %s239 = ssub.s32 128, 128
      %240 = vsyncadd [#allocation3], %s239
      %s242 = sshll.u32 [#allocation2], 4
      %s243 = int_to_ptr.vmem [resolvable:$true] %s242
      %245 = dma.vmem_to_hbm [thread:$0]  %s243, 128, %s5, [#allocation3]
    $region25: #{tpu_custom_call.1} parent=1 // pred_fallthru
      _
    // Predicated region
    $region26: #{tpu_custom_call.1} parent=1 // pred_check
      _
    $region27: #{tpu_custom_call.1} parent=1 // pred_check_branch
      %247 = sbr.rel (0) target = $region29
    $region28: #{tpu_custom_call.1} parent=1 // pred_region
      %248 = dma.done [#allocation3], 128
    $region29: #{tpu_custom_call.1} parent=1 // pred_fallthru
      _
    %249 = vsyncpa [#allocation3], 1

</llo_original>
